<compile_context>
chip_gen: v6e
topology: v6e:2x2x1
jax: 0.10.0
libtpu: 0.0.40
codegen_flags: <defaults>
</compile_context>

<pallas_src>
import functools

import jax
import jax.numpy as jnp
from jax.experimental import pallas as pl
from jax.experimental.pallas import tpu as pltpu

EPS = 1e-5


def _round_up(n, m):
    return ((n + m - 1) // m) * m


# ---------------------------------------------------------------------------
# Kernel 1: docvec transform  (Linear -> BatchNorm -> Sigmoid) x 2.
# Runs once per forward, fully VMEM-resident (tiny [B, H] work; BatchNorm
# needs all of B at once so it cannot be tiled over B anyway).
# ---------------------------------------------------------------------------
def _docvec_kernel(x_ref, w1_ref, b1_ref, g1_ref, be1_ref,
                   w2_ref, b2_ref, g2_ref, be2_ref, docvec_ref):
    x = x_ref[...]                                               # [B, Din] f32

    def bn_sigmoid(h, g, be):
        # Two-pass (centered) biased variance: matches PyTorch BatchNorm1d in
        # training mode and avoids E[h^2] - mean^2 catastrophic cancellation.
        mean = jnp.mean(h, axis=0, keepdims=True)
        d = h - mean
        var = jnp.mean(d * d, axis=0, keepdims=True)
        return jax.nn.sigmoid(d * jax.lax.rsqrt(var + EPS) * g + be)

    h = jnp.dot(x, w1_ref[...], preferred_element_type=jnp.float32) + b1_ref[...]
    h = bn_sigmoid(h, g1_ref[...], be1_ref[...])
    h = jnp.dot(h, w2_ref[...], preferred_element_type=jnp.float32) + b2_ref[...]
    h = bn_sigmoid(h, g2_ref[...], be2_ref[...])
    docvec_ref[...] = h.astype(docvec_ref.dtype)                 # bf16 for MXU


# ---------------------------------------------------------------------------
# Kernel 2: streaming decode   out[:, tile] = sigmoid(docvec @ emb[:, tile]).
# docvec is VMEM-resident (constant index_map); emb tiles stream from HBM and
# are auto double-buffered by the BlockSpec pipeline.
# ---------------------------------------------------------------------------
def _decode_kernel(docvec_ref, emb_ref, out_ref):
    logits = jnp.dot(docvec_ref[...], emb_ref[...],              # [B,H]@[H,TV]
                     preferred_element_type=jnp.float32)
    out_ref[...] = jax.nn.sigmoid(logits).astype(out_ref.dtype)


# ---------------------------------------------------------------------------
# One-time parameter preparation (do NOT call per forward).
# ---------------------------------------------------------------------------
def prepare_params(params, *, tv=None, out_dtype=jnp.float32):
    """Returns a prepared-parameter dict for w2v_decoder_forward.

    - emb is stored as [H, V] bf16 (lane-dense on the huge vocab axis, native
      [K, N] MXU rhs, robust to H not being a multiple of 128), padded along V
      to a multiple of the tile so the forward never pads.
    - Small Linear weights are pre-transposed; 1-D vectors become [1, H] rows.
    """
    H, _ = params["w1"].shape
    V = params["emb"].shape[0]

    if tv is None:
        if V <= 512:
            tv = V                       # single full-extent tile, no padding
        else:
            tv = 4096                    # 256-multiple (v6e/v7x MXU N dim)
            # Keep the double-buffered emb stream comfortably inside v7x VMEM.
            while tv > 256 and 2 * (H * tv * 2) > (24 << 20):
                tv //= 2
    vp = V if tv == V else _round_up(V, tv)

    emb_hv = params["emb"].T.astype(jnp.bfloat16)                # [H, V]
    if vp != V:
        emb_hv = jnp.pad(emb_hv, ((0, 0), (0, vp - V)))          # once, not per call

    row = lambda v: v.reshape(1, -1).astype(jnp.float32)
    return dict(
        w1t=params["w1"].T.astype(jnp.float32), b1=row(params["b1"]),
        g1=row(params["g1"]), be1=row(params["be1"]),
        w2t=params["w2"].T.astype(jnp.float32), b2=row(params["b2"]),
        g2=row(params["g2"]), be2=row(params["be2"]),
        emb_hv=emb_hv, V=V, vp=vp, tv=tv, out_dtype=out_dtype,
    )


@functools.partial(jax.jit, static_argnames=("tv", "vp", "v", "out_dtype"))
def _forward_impl(x, w1t, b1, g1, be1, w2t, b2, g2, be2, emb_hv, *,
                  tv, vp, v, out_dtype):
    B = x.shape[0]
    H = w1t.shape[1]

    # ---- Stage 1: docvec (tiny, fully resident, whole arrays in VMEM).
    docvec = pl.pallas_call(
        _docvec_kernel,
        out_shape=jax.ShapeDtypeStruct((B, H), jnp.bfloat16),
    )(x, w1t, b1, g1, be1, w2t, b2, g2, be2)

    # ---- Stage 2: streaming matmul + sigmoid over V tiles.
    out_bytes = jnp.dtype(out_dtype).itemsize
    cost = pl.CostEstimate(
        flops=2 * B * vp * H,
        transcendentals=B * vp,
        bytes_accessed=H * vp * 2 + B * vp * out_bytes + B * H * 2)

    out = pl.pallas_call(
        _decode_kernel,
        out_shape=jax.ShapeDtypeStruct((B, vp), out_dtype),
        grid=(vp // tv,),
        in_specs=[
            pl.BlockSpec((B, H), lambda j: (0, 0)),     # docvec: VMEM-resident
            pl.BlockSpec((H, tv), lambda j: (0, j)),    # emb tile: streamed
        ],
        out_specs=pl.BlockSpec((B, tv), lambda j: (0, j)),
        compiler_params=pltpu.CompilerParams(
            dimension_semantics=("parallel",),          # megacore on v7x
            vmem_limit_bytes=48 << 20),                 # < v7x 64 MiB physical
        cost_estimate=cost,
    )(docvec, emb_hv)
    # TODO(synk): for very large B (>=512), add a second grid axis over B with
    # a (tb, tv) out tile to bound VMEM and raise MXU M-utilization.

    if vp != v:
        # TODO(synk): return the padded buffer and slice lazily at the consumer
        # to avoid this per-call B*V copy when V does not divide the tile.
        out = out[:, :v]
    return out


def w2v_decoder_forward(x, prep):
    """x: [B, input_dim] f32.  prep: output of prepare_params()."""
    return _forward_impl(
        x, prep["w1t"], prep["b1"], prep["g1"], prep["be1"],
        prep["w2t"], prep["b2"], prep["g2"], prep["be2"], prep["emb_hv"],
        tv=prep["tv"], vp=prep["vp"], v=prep["V"], out_dtype=prep["out_dtype"])


def reference_forward(x, p):
    """Pure-JAX reference mirroring the PyTorch module (bf16 final matmul)."""
    h = x @ p["w1"].T + p["b1"]
    m = h.mean(0); v = ((h - m) ** 2).mean(0)
    h = jax.nn.sigmoid((h - m) / jnp.sqrt(v + EPS) * p["g1"] + p["be1"])
    h = h @ p["w2"].T + p["b2"]
    m = h.mean(0); v = ((h - m) ** 2).mean(0)
    docvec = jax.nn.sigmoid((h - m) / jnp.sqrt(v + EPS) * p["g2"] + p["be2"])
    logits = jnp.dot(docvec.astype(jnp.bfloat16),
                     p["emb"].T.astype(jnp.bfloat16),
                     preferred_element_type=jnp.float32)
    return jax.nn.sigmoid(logits)


if __name__ == "__main__":
    B, INPUT_DIM, HIDDEN_DIM, OUTPUT_DIM = 8, 16, 32, 64   # output_dim == vocab_size

    key = jax.random.PRNGKey(0)
    k = jax.random.split(key, 6)
    params = {
        "w1": jax.random.normal(k[0], (HIDDEN_DIM, INPUT_DIM), jnp.float32) * 0.1,
        "b1": jax.random.normal(k[1], (HIDDEN_DIM,), jnp.float32) * 0.1,
        "g1": jnp.ones((HIDDEN_DIM,), jnp.float32),
        "be1": jnp.zeros((HIDDEN_DIM,), jnp.float32),
        "w2": jax.random.normal(k[2], (HIDDEN_DIM, HIDDEN_DIM), jnp.float32) * 0.1,
        "b2": jax.random.normal(k[3], (HIDDEN_DIM,), jnp.float32) * 0.1,
        "g2": jnp.ones((HIDDEN_DIM,), jnp.float32),
        "be2": jnp.zeros((HIDDEN_DIM,), jnp.float32),
        "emb": jax.random.normal(k[4], (OUTPUT_DIM, HIDDEN_DIM), jnp.float32) * 0.1,
    }
    x = jax.random.normal(k[5], (B, INPUT_DIM), jnp.float32)

    prep = prepare_params(params)                 # one-time cast/transpose/pad
    out = jax.block_until_ready(w2v_decoder_forward(x, prep))
    ref = jax.block_until_ready(reference_forward(x, params))

    assert out.shape == (B, OUTPUT_DIM)
    assert jnp.allclose(out, ref, atol=5e-3, rtol=1e-3), "mismatch vs reference"
    print("KERNEL_OK")
</pallas_src>

<mosaic_0001>
module attributes {stable_mosaic.version = 11 : i64} {
  func.func @_decode_kernel(%arg0: i32, %arg1: memref<8x32xbf16, #tpu.memory_space<vmem>>, %arg2: memref<32x64xbf16, #tpu.memory_space<vmem>>, %arg3: memref<8x64xf32, #tpu.memory_space<vmem>>) attributes {dimension_semantics = [#tpu.dimension_semantics<parallel>], iteration_bounds = array<i64: 1>, scalar_prefetch = 0 : i64, scratch_operands = 0 : i64, tpu.core_type = #tpu.core_type<tc>, window_params = [{pipeline_mode = #tpu.pipeline_mode<synchronous>, transform_indices = @transform_0, window_bounds = array<i64: 8, 32>}, {transform_indices = @transform_1, window_bounds = array<i64: 32, 64>}, {transform_indices = @transform_2, window_bounds = array<i64: 8, 64>}]} {
    %c0 = arith.constant 0 : index
    %c0_0 = arith.constant 0 : index
    %0 = vector.load %arg1[%c0, %c0_0] : memref<8x32xbf16, #tpu.memory_space<vmem>>, vector<8x32xbf16>
    %c0_1 = arith.constant 0 : index
    %c0_2 = arith.constant 0 : index
    %1 = vector.load %arg2[%c0_1, %c0_2] : memref<32x64xbf16, #tpu.memory_space<vmem>>, vector<32x64xbf16>
    %cst = arith.constant dense<0.000000e+00> : vector<8x64xf32>
    %2 = tpu.matmul %0, %1, %cst {dimension_numbers = #tpu.dot_dimension_numbers<[1], [0], [0], [1], [0, 0, 1, 1], [], []>} : vector<8x32xbf16>, vector<32x64xbf16>, vector<8x64xf32> -> vector<8x64xf32>
    %3 = arith.negf %2 : vector<8x64xf32>
    %4 = math.exp %3 : vector<8x64xf32>
    %cst_3 = arith.constant 1.000000e+00 : f32
    %5 = vector.broadcast %cst_3 : f32 to vector<8x64xf32>
    %6 = arith.addf %5, %4 : vector<8x64xf32>
    %7 = arith.divf %5, %6 : vector<8x64xf32>
    %c0_4 = arith.constant 0 : index
    %c0_5 = arith.constant 0 : index
    %8 = vector.load %arg3[%c0_4, %c0_5] : memref<8x64xf32, #tpu.memory_space<vmem>>, vector<8x64xf32>
    tpu.vector_store %arg3[%c0_4, %c0_5], %7 {strides = array<i32>} : memref<8x64xf32, #tpu.memory_space<vmem>>, vector<8x64xf32>,
    return
  }
  func.func @transform_0(%arg0: i32) -> (i32, i32) {
    %c0_i32 = arith.constant 0 : i32
    %c0_i32_0 = arith.constant 0 : i32
    %c0_i32_1 = arith.constant 0 : i32
    return %c0_i32, %c0_i32_0 : i32, i32
  }
  func.func @transform_1(%arg0: i32) -> (i32, i32) {
    %c0_i32 = arith.constant 0 : i32
    %c0_i32_0 = arith.constant 0 : i32
    return %c0_i32, %arg0 : i32, i32
  }
  func.func @transform_2(%arg0: i32) -> (i32, i32) {
    %c0_i32 = arith.constant 0 : i32
    %c0_i32_0 = arith.constant 0 : i32
    return %c0_i32, %arg0 : i32, i32
  }
}

module attributes {stable_mosaic.version = 11 : i64} {
  func.func @_docvec_kernel(%arg0: memref<8x16xf32, #tpu.memory_space<vmem>>, %arg1: memref<16x32xf32, #tpu.memory_space<vmem>>, %arg2: memref<1x32xf32, #tpu.memory_space<vmem>>, %arg3: memref<1x32xf32, #tpu.memory_space<vmem>>, %arg4: memref<1x32xf32, #tpu.memory_space<vmem>>, %arg5: memref<32x32xf32, #tpu.memory_space<vmem>>, %arg6: memref<1x32xf32, #tpu.memory_space<vmem>>, %arg7: memref<1x32xf32, #tpu.memory_space<vmem>>, %arg8: memref<1x32xf32, #tpu.memory_space<vmem>>, %arg9: memref<8x32xbf16, #tpu.memory_space<vmem>>) attributes {dimension_semantics = [], scalar_prefetch = 0 : i64, scratch_operands = 0 : i64, tpu.core_type = #tpu.core_type<tc>} {
    %c0 = arith.constant 0 : index
    %c0_0 = arith.constant 0 : index
    %0 = vector.load %arg0[%c0, %c0_0] : memref<8x16xf32, #tpu.memory_space<vmem>>, vector<8x16xf32>
    %c0_1 = arith.constant 0 : index
    %c0_2 = arith.constant 0 : index
    %1 = vector.load %arg1[%c0_1, %c0_2] : memref<16x32xf32, #tpu.memory_space<vmem>>, vector<16x32xf32>
    %cst = arith.constant dense<0.000000e+00> : vector<8x32xf32>
    %2 = tpu.matmul %0, %1, %cst {dimension_numbers = #tpu.dot_dimension_numbers<[1], [0], [0], [1], [0, 0, 1, 1], [], []>} : vector<8x16xf32>, vector<16x32xf32>, vector<8x32xf32> -> vector<8x32xf32>
    %c0_3 = arith.constant 0 : index
    %c0_4 = arith.constant 0 : index
    %3 = vector.load %arg2[%c0_3, %c0_4] : memref<1x32xf32, #tpu.memory_space<vmem>>, vector<1x32xf32>
    %4 = vector.broadcast %3 : vector<1x32xf32> to vector<8x32xf32>
    %5 = arith.addf %2, %4 : vector<8x32xf32>
    %c0_5 = arith.constant 0 : index
    %c0_6 = arith.constant 0 : index
    %6 = vector.load %arg3[%c0_5, %c0_6] : memref<1x32xf32, #tpu.memory_space<vmem>>, vector<1x32xf32>
    %c0_7 = arith.constant 0 : index
    %c0_8 = arith.constant 0 : index
    %7 = vector.load %arg4[%c0_7, %c0_8] : memref<1x32xf32, #tpu.memory_space<vmem>>, vector<1x32xf32>
    %cst_9 = arith.constant dense<0.000000e+00> : vector<32xf32>
    %8 = vector.multi_reduction <add>, %5, %cst_9 [0] : vector<8x32xf32> to vector<32xf32>
    %9 = vector.shape_cast %8 : vector<32xf32> to vector<1x32xf32>
    %cst_10 = arith.constant 8.000000e+00 : f32
    %10 = vector.broadcast %cst_10 : f32 to vector<1x32xf32>
    %11 = arith.divf %9, %10 : vector<1x32xf32>
    %12 = vector.broadcast %11 : vector<1x32xf32> to vector<8x32xf32>
    %13 = arith.subf %5, %12 : vector<8x32xf32>
    %14 = arith.mulf %13, %13 : vector<8x32xf32>
    %cst_11 = arith.constant dense<0.000000e+00> : vector<32xf32>
    %15 = vector.multi_reduction <add>, %14, %cst_11 [0] : vector<8x32xf32> to vector<32xf32>
    %16 = vector.shape_cast %15 : vector<32xf32> to vector<1x32xf32>
    %cst_12 = arith.constant 8.000000e+00 : f32
    %17 = vector.broadcast %cst_12 : f32 to vector<1x32xf32>
    %18 = arith.divf %16, %17 : vector<1x32xf32>
    %cst_13 = arith.constant 9.99999974E-6 : f32
    %19 = vector.broadcast %cst_13 : f32 to vector<1x32xf32>
    %20 = arith.addf %18, %19 : vector<1x32xf32>
    %21 = math.rsqrt %20 : vector<1x32xf32>
    %22 = vector.broadcast %21 : vector<1x32xf32> to vector<8x32xf32>
    %23 = arith.mulf %13, %22 : vector<8x32xf32>
    %24 = vector.broadcast %6 : vector<1x32xf32> to vector<8x32xf32>
    %25 = arith.mulf %23, %24 : vector<8x32xf32>
    %26 = vector.broadcast %7 : vector<1x32xf32> to vector<8x32xf32>
    %27 = arith.addf %25, %26 : vector<8x32xf32>
    %28 = arith.negf %27 : vector<8x32xf32>
    %29 = math.exp %28 : vector<8x32xf32>
    %cst_14 = arith.constant 1.000000e+00 : f32
    %30 = vector.broadcast %cst_14 : f32 to vector<8x32xf32>
    %31 = arith.addf %30, %29 : vector<8x32xf32>
    %32 = arith.divf %30, %31 : vector<8x32xf32>
    %c0_15 = arith.constant 0 : index
    %c0_16 = arith.constant 0 : index
    %33 = vector.load %arg5[%c0_15, %c0_16] : memref<32x32xf32, #tpu.memory_space<vmem>>, vector<32x32xf32>
    %cst_17 = arith.constant dense<0.000000e+00> : vector<8x32xf32>
    %34 = tpu.matmul %32, %33, %cst_17 {dimension_numbers = #tpu.dot_dimension_numbers<[1], [0], [0], [1], [0, 0, 1, 1], [], []>} : vector<8x32xf32>, vector<32x32xf32>, vector<8x32xf32> -> vector<8x32xf32>
    %c0_18 = arith.constant 0 : index
    %c0_19 = arith.constant 0 : index
    %35 = vector.load %arg6[%c0_18, %c0_19] : memref<1x32xf32, #tpu.memory_space<vmem>>, vector<1x32xf32>
    %36 = vector.broadcast %35 : vector<1x32xf32> to vector<8x32xf32>
    %37 = arith.addf %34, %36 : vector<8x32xf32>
    %c0_20 = arith.constant 0 : index
    %c0_21 = arith.constant 0 : index
    %38 = vector.load %arg7[%c0_20, %c0_21] : memref<1x32xf32, #tpu.memory_space<vmem>>, vector<1x32xf32>
    %c0_22 = arith.constant 0 : index
    %c0_23 = arith.constant 0 : index
    %39 = vector.load %arg8[%c0_22, %c0_23] : memref<1x32xf32, #tpu.memory_space<vmem>>, vector<1x32xf32>
    %cst_24 = arith.constant dense<0.000000e+00> : vector<32xf32>
    %40 = vector.multi_reduction <add>, %37, %cst_24 [0] : vector<8x32xf32> to vector<32xf32>
    %41 = vector.shape_cast %40 : vector<32xf32> to vector<1x32xf32>
    %cst_25 = arith.constant 8.000000e+00 : f32
    %42 = vector.broadcast %cst_25 : f32 to vector<1x32xf32>
    %43 = arith.divf %41, %42 : vector<1x32xf32>
    %44 = vector.broadcast %43 : vector<1x32xf32> to vector<8x32xf32>
    %45 = arith.subf %37, %44 : vector<8x32xf32>
    %46 = arith.mulf %45, %45 : vector<8x32xf32>
    %cst_26 = arith.constant dense<0.000000e+00> : vector<32xf32>
    %47 = vector.multi_reduction <add>, %46, %cst_26 [0] : vector<8x32xf32> to vector<32xf32>
    %48 = vector.shape_cast %47 : vector<32xf32> to vector<1x32xf32>
    %cst_27 = arith.constant 8.000000e+00 : f32
    %49 = vector.broadcast %cst_27 : f32 to vector<1x32xf32>
    %50 = arith.divf %48, %49 : vector<1x32xf32>
    %cst_28 = arith.constant 9.99999974E-6 : f32
    %51 = vector.broadcast %cst_28 : f32 to vector<1x32xf32>
    %52 = arith.addf %50, %51 : vector<1x32xf32>
    %53 = math.rsqrt %52 : vector<1x32xf32>
    %54 = vector.broadcast %53 : vector<1x32xf32> to vector<8x32xf32>
    %55 = arith.mulf %45, %54 : vector<8x32xf32>
    %56 = vector.broadcast %38 : vector<1x32xf32> to vector<8x32xf32>
    %57 = arith.mulf %55, %56 : vector<8x32xf32>
    %58 = vector.broadcast %39 : vector<1x32xf32> to vector<8x32xf32>
    %59 = arith.addf %57, %58 : vector<8x32xf32>
    %60 = arith.negf %59 : vector<8x32xf32>
    %61 = math.exp %60 : vector<8x32xf32>
    %cst_29 = arith.constant 1.000000e+00 : f32
    %62 = vector.broadcast %cst_29 : f32 to vector<8x32xf32>
    %63 = arith.addf %62, %61 : vector<8x32xf32>
    %64 = arith.divf %62, %63 : vector<8x32xf32>
    %65 = arith.truncf %64 : vector<8x32xf32> to vector<8x32xbf16>
    %c0_30 = arith.constant 0 : index
    %c0_31 = arith.constant 0 : index
    %66 = vector.load %arg9[%c0_30, %c0_31] : memref<8x32xbf16, #tpu.memory_space<vmem>>, vector<8x32xbf16>
    tpu.vector_store %arg9[%c0_30, %c0_31], %65 {strides = array<i32>} : memref<8x32xbf16, #tpu.memory_space<vmem>>, vector<8x32xbf16>,
    return
  }
}

</mosaic_0001>

<llo_original>
// kernel: _forward_impl.2
$region0: #{_forward_impl.2}
  #allocation0 [shape = 'u32[]', space=smem, size = 0x4, offset = 0x4, fixed_abs, tag = 'smem constant byte address 0x4 - core index']
  #allocation1 [shape = 'u32[144,128]{1,0:T(1,128)}', space=vmem, size = 0x12000, scoped, tag = 'internal scratch']
  %s0 = inlined_call_operand.hbm [shape: f32[8,16], index: 0, kind: input, shape index: {}]
  %s1 = inlined_call_operand.hbm [shape: f32[16,32], index: 1, kind: input, shape index: {}]
  %s2 = inlined_call_operand.vmem [shape: f32[1,32], index: 2, kind: input, shape index: {}]
  %s3 = inlined_call_operand.vmem [shape: f32[1,32], index: 3, kind: input, shape index: {}]
  %s4 = inlined_call_operand.vmem [shape: f32[1,32], index: 4, kind: input, shape index: {}]
  %s5 = inlined_call_operand.hbm [shape: f32[32,32], index: 5, kind: input, shape index: {}]
  %s6 = inlined_call_operand.vmem [shape: f32[1,32], index: 6, kind: input, shape index: {}]
  %s7 = inlined_call_operand.vmem [shape: f32[1,32], index: 7, kind: input, shape index: {}]
  %s8 = inlined_call_operand.vmem [shape: f32[1,32], index: 8, kind: input, shape index: {}]
  %s9 = inlined_call_operand.vmem [shape: bf16[8,32], index: 9, kind: output, shape index: {}]
  %s10 = sld [smem:[#allocation0]]
  $region58: #{_forward_impl.2} parent=0
    _
  %s12 = ssub.s32 1, %s10
  %s13 = scalar_select 0, %s12, %s10
  $region1: #{_forward_impl.2} parent=0
    #allocation2 [shape = 'u8[4096]{0}', space=vmem, size = 0x1000, scoped, tag = 'input window, operand 0, single buffered']
    #allocation3 [shape = 's32[1]{0}', space=sflag, size = 0x4, scoped, tag = 'scoped memory for _forward_impl.2']
    #allocation4 [shape = 'u8[8192]{0}', space=vmem, size = 0x2000, scoped, tag = 'input window, operand 1, single buffered']
    #allocation5 [shape = 's32[1]{0}', space=sflag, size = 0x4, scoped, tag = 'scoped memory for _forward_impl.2']
    #allocation6 [shape = 'u8[16384]{0}', space=vmem, size = 0x4000, scoped, tag = 'input window, operand 5, single buffered']
    %14 = vsyncpa [#allocation3], 0
    %15 = vsyncpa [#allocation5], 0
    // Predicated region
    $region2: #{_forward_impl.2} parent=1 // pred_check
      _
    $region3: #{_forward_impl.2} parent=1 // pred_check_branch
      %17 = sbr.rel (0) target = $region5
    $region4: #{_forward_impl.2} parent=1 // pred_region
      %s19 = ssub.s32 128, 128
      %20 = vsyncadd [#allocation3], %s19
      %s22 = sshll.u32 [#allocation2], 4
      %s23 = int_to_ptr.vmem [resolvable:$true] %s22
      %25 = dma.hbm_to_vmem [thread:$0]  %s0, 128, %s23, [#allocation3]
    $region5: #{_forward_impl.2} parent=1 // pred_fallthru
      _
    // Predicated region
    $region6: #{_forward_impl.2} parent=1 // pred_check
      _
    $region7: #{_forward_impl.2} parent=1 // pred_check_branch
      %27 = sbr.rel (0) target = $region9
    $region8: #{_forward_impl.2} parent=1 // pred_region
      %s29 = ssub.s32 256, 256
      %30 = vsyncadd [#allocation5], %s29
      %s31 = sshll.u32 [#allocation4], 4
      %s32 = int_to_ptr.vmem [resolvable:$true] %s31
      %37 = dma.hbm_to_vmem [thread:$0]  %s1, 256, %s32, [#allocation5], 128, 128, 8
    $region9: #{_forward_impl.2} parent=1 // pred_fallthru
      _
    // Predicated region
    $region10: #{_forward_impl.2} parent=1 // pred_check
      _
    $region11: #{_forward_impl.2} parent=1 // pred_check_branch
      %39 = sbr.rel (0) target = $region13
    $region12: #{_forward_impl.2} parent=1 // pred_region
      _
    $region13: #{_forward_impl.2} parent=1 // pred_fallthru
      _
    // Predicated region
    $region14: #{_forward_impl.2} parent=1 // pred_check
      _
    $region15: #{_forward_impl.2} parent=1 // pred_check_branch
      %41 = sbr.rel (0) target = $region17
    $region16: #{_forward_impl.2} parent=1 // pred_region
      _
    $region17: #{_forward_impl.2} parent=1 // pred_fallthru
      _
    // Predicated region
    $region18: #{_forward_impl.2} parent=1 // pred_check
      _
    $region19: #{_forward_impl.2} parent=1 // pred_check_branch
      %43 = sbr.rel (0) target = $region21
    $region20: #{_forward_impl.2} parent=1 // pred_region
      _
    $region21: #{_forward_impl.2} parent=1 // pred_fallthru
      _
    // Predicated region
    $region22: #{_forward_impl.2} parent=1 // pred_check
      _
    $region23: #{_forward_impl.2} parent=1 // pred_check_branch
      %45 = sbr.rel (0) target = $region25
    $region24: #{_forward_impl.2} parent=1 // pred_region
      %s47 = ssub.s32 512, 512
      %48 = vsyncadd [#allocation5], %s47
      %s49 = sshll.u32 [#allocation6], 4
      %s50 = int_to_ptr.vmem [resolvable:$true] %s49
      %55 = dma.hbm_to_vmem [thread:$0]  %s5, 512, %s50, [#allocation5], 128, 128, 8
    $region25: #{_forward_impl.2} parent=1 // pred_fallthru
      _
    // Predicated region
    $region26: #{_forward_impl.2} parent=1 // pred_check
      _
    $region27: #{_forward_impl.2} parent=1 // pred_check_branch
      %57 = sbr.rel (0) target = $region29
    $region28: #{_forward_impl.2} parent=1 // pred_region
      _
    $region29: #{_forward_impl.2} parent=1 // pred_fallthru
      _
    // Predicated region
    $region30: #{_forward_impl.2} parent=1 // pred_check
      _
    $region31: #{_forward_impl.2} parent=1 // pred_check_branch
      %59 = sbr.rel (0) target = $region33
    $region32: #{_forward_impl.2} parent=1 // pred_region
      _
    $region33: #{_forward_impl.2} parent=1 // pred_fallthru
      _
    // Predicated region
    $region34: #{_forward_impl.2} parent=1 // pred_check
      _
    $region35: #{_forward_impl.2} parent=1 // pred_check_branch
      %61 = sbr.rel (0) target = $region37
    $region36: #{_forward_impl.2} parent=1 // pred_region
      _
    $region37: #{_forward_impl.2} parent=1 // pred_fallthru
      _
    // Predicated region
    $region38: #{_forward_impl.2} parent=1 // pred_check
      _
    $region39: #{_forward_impl.2} parent=1 // pred_check_branch
      %63 = sbr.rel (0) target = $region41
    $region40: #{_forward_impl.2} parent=1 // pred_region
      %64 = dma.done [#allocation3], 128
    $region41: #{_forward_impl.2} parent=1 // pred_fallthru
      _
    // Predicated region
    $region42: #{_forward_impl.2} parent=1 // pred_check
      _
    $region43: #{_forward_impl.2} parent=1 // pred_check_branch
      %66 = sbr.rel (0) target = $region45
    $region44: #{_forward_impl.2} parent=1 // pred_region
      %67 = dma.done [#allocation5], 256
    $region45: #{_forward_impl.2} parent=1 // pred_fallthru
      _
    // Predicated region
    $region46: #{_forward_impl.2} parent=1 // pred_check
      _
    $region47: #{_forward_impl.2} parent=1 // pred_check_branch
      %69 = sbr.rel (0) target = $region49
    $region48: #{_forward_impl.2} parent=1 // pred_region
      %70 = dma.done [#allocation5], 512
    $region49: #{_forward_impl.2} parent=1 // pred_fallthru
      _
    %v71 = vld [vmem:[#allocation2] sm:$0xff]
    %v72 = vld [vmem:[#allocation4] sm:$0xff]
    %v73 = vld [vmem:[#allocation4 + $0x8] sm:$0xff]
    %v74 = vld [vmem:[%s2] sm:$0x1]
    %v76 = vlaneseq
    %v77 = vshrl.u32 %v76, 7
    %v78 = vsub.s32 0, %v77
    %v79 = vrot.slane %v74, %v78
    %vm81 = vcmask 130048
    %v83 = vsel %vm81, %v71, 0
    %85 = vmatprep.subr.mxu0 0.0
    %86 = vmatpush1.msra.mxu0 0.0
    %87 = vmatprep.subr.mxu0 0.0
    %88 = vmatpush1.msra.mxu0 0.0
    %89 = vmatprep.subr.mxu0 0.0
    %90 = vmatpush1.msra.mxu0 0.0
    %91 = vmatprep.subr.mxu0 0.0
    %92 = vmatpush1.msra.mxu0 0.0
    %93 = vmatprep.subr.mxu0 0.0
    %94 = vmatpush1.msra.mxu0 0.0
    %95 = vmatprep.subr.mxu0 0.0
    %96 = vmatpush1.msra.mxu0 0.0
    %97 = vmatprep.subr.mxu0 0.0
    %98 = vmatpush1.msra.mxu0 0.0
    %99 = vmatprep.subr.mxu0 0.0
    %100 = vmatpush1.msra.mxu0 0.0
    %101 = vmatprep.subr.mxu0 0.0
    %102 = vmatpush1.msra.mxu0 0.0
    %103 = vmatprep.subr.mxu0 0.0
    %104 = vmatpush1.msra.mxu0 0.0
    %105 = vmatprep.subr.mxu0 0.0
    %106 = vmatpush1.msra.mxu0 0.0
    %107 = vmatprep.subr.mxu0 0.0
    %108 = vmatpush1.msra.mxu0 0.0
    %109 = vmatprep.subr.mxu0 0.0
    %110 = vmatpush1.msra.mxu0 0.0
    %111 = vmatprep.subr.mxu0 0.0
    %112 = vmatpush1.msra.mxu0 0.0
    %113 = vmatprep.subr.mxu0 0.0
    %114 = vmatpush1.msra.mxu0 %v73
    %115 = vmatprep.subr.mxu0 0.0
    %116 = vmatpush1.msra.mxu0 %v72
    %117 = vmatprep.subr.mxu0 0.0
    %118 = vmatpush2.msra.mxu0 0.0
    %119 = vmatprep.subr.mxu0 0.0
    %120 = vmatpush2.msra.mxu0 0.0
    %121 = vmatprep.subr.mxu0 0.0
    %122 = vmatpush2.msra.mxu0 0.0
    %123 = vmatprep.subr.mxu0 0.0
    %124 = vmatpush2.msra.mxu0 0.0
    %125 = vmatprep.subr.mxu0 0.0
    %126 = vmatpush2.msra.mxu0 0.0
    %127 = vmatprep.subr.mxu0 0.0
    %128 = vmatpush2.msra.mxu0 0.0
    %129 = vmatprep.subr.mxu0 0.0
    %130 = vmatpush2.msra.mxu0 0.0
    %131 = vmatprep.subr.mxu0 0.0
    %132 = vmatpush2.msra.mxu0 0.0
    %133 = vmatprep.subr.mxu0 0.0
    %134 = vmatpush2.msra.mxu0 0.0
    %135 = vmatprep.subr.mxu0 0.0
    %136 = vmatpush2.msra.mxu0 0.0
    %137 = vmatprep.subr.mxu0 0.0
    %138 = vmatpush2.msra.mxu0 0.0
    %139 = vmatprep.subr.mxu0 0.0
    %140 = vmatpush2.msra.mxu0 0.0
    %141 = vmatprep.subr.mxu0 0.0
    %142 = vmatpush2.msra.mxu0 0.0
    %143 = vmatprep.subr.mxu0 0.0
    %144 = vmatpush2.msra.mxu0 0.0
    %145 = vmatprep.subr.mxu0 0.0
    %146 = vmatpush2.msra.mxu0 0.0
    %147 = vmatprep.subr.mxu0 0.0
    %148 = vmatpush2.msra.mxu0 0.0
    %149 = vmatprep.mubr.f32.mxu0 0.0
    %150 = vmatmul.mubr.f32.gmra.mxu0 %v83
    %v151 = vpop.f32.mrf.mxu0
    %v152 = vadd.f32 %v79, %v151
    %v153 = vpop.f32.mrf.mxu0
    %154 = vdwg.mxu0
    %v155 = vld [vmem:[%s3] sm:$0x1]
    %v156 = vld [vmem:[%s4] sm:$0x1]
    %vm157 = vcmask 261120
    %v158 = vsel %vm157, %v152, 0.0
    %v159 = vrot.slane %v158, 4
    %v160 = vadd.f32 %v158, %v159
    %v161 = vrot.slane %v160, 2
    %v162 = vadd.f32 %v160, %v161
    %v163 = vrot.slane %v162, 1
    %v164 = vadd.f32 %v162, %v163
    %v165 = vrcp.pop 8.0
    %v166 = vmul.f32 %v164, %v165
    %v167 = vsub.f32 %v152, %v166
    %v168 = vmul.f32 %v167, %v167
    %v169 = vsel %vm157, %v168, 0.0
    %v170 = vrot.slane %v169, 4
    %v171 = vadd.f32 %v169, %v170
    %v172 = vrot.slane %v171, 2
    %v173 = vadd.f32 %v171, %v172
    %v174 = vrot.slane %v173, 1
    %v175 = vadd.f32 %v173, %v174
    %v176 = vmul.f32 %v175, %v165
    %v177 = vadd.f32 %v176, 1e-05
    %v178 = vrsqrt.pop %v177
    %v179 = vmul.f32 %v167, %v178
    %v181 = vlaneseq
    %v182 = vshrl.u32 %v181, 7
    %v183 = vsub.s32 0, %v182
    %v184 = vrot.slane %v155, %v183
    %v186 = vmul.f32 %v179, %v184
    %v188 = vlaneseq
    %v189 = vshrl.u32 %v188, 7
    %v190 = vsub.s32 0, %v189
    %v191 = vrot.slane %v156, %v190
    %v193 = vadd.f32 %v186, %v191
    %v194 = vxor.u32 %v193, 2147483648
    %v195 = vmul.f32 %v194, 1.442695
    %v196 = vpow.pop %v195
    %v197 = vadd.f32 %v196, 1.0
    %v198 = vrcp.pop %v197
    %v199 = vmul.f32 1.0, %v198
    %v200 = vld [vmem:[#allocation6] sm:$0xff]
    %v201 = vld [vmem:[#allocation6 + $0x8] sm:$0xff]
    %v202 = vld [vmem:[#allocation6 + $0x10] sm:$0xff]
    %v203 = vld [vmem:[#allocation6 + $0x18] sm:$0xff]
    %v204 = vld [vmem:[%s6] sm:$0x1]
    %v206 = vlaneseq
    %v207 = vshrl.u32 %v206, 7
    %v208 = vsub.s32 0, %v207
    %v209 = vrot.slane %v204, %v208
    %v212 = vsel %vm157, %v199, 0
    %214 = vmatprep.subr.mxu0 0.0
    %215 = vmatpush1.msra.mxu0 0.0
    %216 = vmatprep.subr.mxu0 0.0
    %217 = vmatpush1.msra.mxu0 0.0
    %218 = vmatprep.subr.mxu0 0.0
    %219 = vmatpush1.msra.mxu0 0.0
    %220 = vmatprep.subr.mxu0 0.0
    %221 = vmatpush1.msra.mxu0 0.0
    %222 = vmatprep.subr.mxu0 0.0
    %223 = vmatpush1.msra.mxu0 0.0
    %224 = vmatprep.subr.mxu0 0.0
    %225 = vmatpush1.msra.mxu0 0.0
    %226 = vmatprep.subr.mxu0 0.0
    %227 = vmatpush1.msra.mxu0 0.0
    %228 = vmatprep.subr.mxu0 0.0
    %229 = vmatpush1.msra.mxu0 0.0
    %230 = vmatprep.subr.mxu0 0.0
    %231 = vmatpush1.msra.mxu0 0.0
    %232 = vmatprep.subr.mxu0 0.0
    %233 = vmatpush1.msra.mxu0 0.0
    %234 = vmatprep.subr.mxu0 0.0
    %235 = vmatpush1.msra.mxu0 0.0
    %236 = vmatprep.subr.mxu0 0.0
    %237 = vmatpush1.msra.mxu0 0.0
    %238 = vmatprep.subr.mxu0 0.0
    %239 = vmatpush1.msra.mxu0 %v203
    %240 = vmatprep.subr.mxu0 0.0
    %241 = vmatpush1.msra.mxu0 %v202
    %242 = vmatprep.subr.mxu0 0.0
    %243 = vmatpush1.msra.mxu0 %v201
    %244 = vmatprep.subr.mxu0 0.0
    %245 = vmatpush1.msra.mxu0 %v200
    %246 = vmatprep.subr.mxu0 0.0
    %247 = vmatpush2.msra.mxu0 0.0
    %248 = vmatprep.subr.mxu0 0.0
    %249 = vmatpush2.msra.mxu0 0.0
    %250 = vmatprep.subr.mxu0 0.0
    %251 = vmatpush2.msra.mxu0 0.0
    %252 = vmatprep.subr.mxu0 0.0
    %253 = vmatpush2.msra.mxu0 0.0
    %254 = vmatprep.subr.mxu0 0.0
    %255 = vmatpush2.msra.mxu0 0.0
    %256 = vmatprep.subr.mxu0 0.0
    %257 = vmatpush2.msra.mxu0 0.0
    %258 = vmatprep.subr.mxu0 0.0
    %259 = vmatpush2.msra.mxu0 0.0
    %260 = vmatprep.subr.mxu0 0.0
    %261 = vmatpush2.msra.mxu0 0.0
    %262 = vmatprep.subr.mxu0 0.0
    %263 = vmatpush2.msra.mxu0 0.0
    %264 = vmatprep.subr.mxu0 0.0
    %265 = vmatpush2.msra.mxu0 0.0
    %266 = vmatprep.subr.mxu0 0.0
    %267 = vmatpush2.msra.mxu0 0.0
    %268 = vmatprep.subr.mxu0 0.0
    %269 = vmatpush2.msra.mxu0 0.0
    %270 = vmatprep.subr.mxu0 0.0
    %271 = vmatpush2.msra.mxu0 0.0
    %272 = vmatprep.subr.mxu0 0.0
    %273 = vmatpush2.msra.mxu0 0.0
    %274 = vmatprep.subr.mxu0 0.0
    %275 = vmatpush2.msra.mxu0 0.0
    %276 = vmatprep.subr.mxu0 0.0
    %277 = vmatpush2.msra.mxu0 0.0
    %278 = vmatprep.mubr.f32.mxu0 0.0
    %279 = vmatmul.mubr.f32.gmra.mxu0 %v212
    %v280 = vpop.f32.mrf.mxu0
    %v281 = vadd.f32 %v209, %v280
    %v282 = vpop.f32.mrf.mxu0
    %283 = vdwg.mxu0
    %v284 = vld [vmem:[%s7] sm:$0x1]
    %v285 = vld [vmem:[%s8] sm:$0x1]
    %v286 = vsel %vm157, %v281, 0.0
    %v287 = vrot.slane %v286, 4
    %v288 = vadd.f32 %v286, %v287
    %v289 = vrot.slane %v288, 2
    %v290 = vadd.f32 %v288, %v289
    %v291 = vrot.slane %v290, 1
    %v292 = vadd.f32 %v290, %v291
    %v293 = vmul.f32 %v292, %v165
    %v294 = vsub.f32 %v281, %v293
    %v295 = vmul.f32 %v294, %v294
    %v296 = vsel %vm157, %v295, 0.0
    %v297 = vrot.slane %v296, 4
    %v298 = vadd.f32 %v296, %v297
    %v299 = vrot.slane %v298, 2
    %v300 = vadd.f32 %v298, %v299
    %v301 = vrot.slane %v300, 1
    %v302 = vadd.f32 %v300, %v301
    %v303 = vmul.f32 %v302, %v165
    %v304 = vadd.f32 %v303, 1e-05
    %v305 = vrsqrt.pop %v304
    %v306 = vmul.f32 %v294, %v305
    %v308 = vlaneseq
    %v309 = vshrl.u32 %v308, 7
    %v310 = vsub.s32 0, %v309
    %v311 = vrot.slane %v284, %v310
    %v313 = vmul.f32 %v306, %v311
    %v315 = vlaneseq
    %v316 = vshrl.u32 %v315, 7
    %v317 = vsub.s32 0, %v316
    %v318 = vrot.slane %v285, %v317
    %v320 = vadd.f32 %v313, %v318
    %v321 = vxor.u32 %v320, 2147483648
    %v322 = vmul.f32 %v321, 1.442695
    %v323 = vpow.pop %v322
    %v324 = vadd.f32 %v323, 1.0
    %v325 = vrcp.pop %v324
    %v326 = vmul.f32 1.0, %v325
    %v327 = vpack.c.bf16 %v326, %v326
    %vm328 = vcmask 257024
    %329 = vst.msk [vmem:[%s9] sm:$0xf] %vm328, %v327
    // Predicated region
    $region50: #{_forward_impl.2} parent=1 // pred_check
      _
    $region51: #{_forward_impl.2} parent=1 // pred_check_branch
      %331 = sbr.rel (0) target = $region53
    $region52: #{_forward_impl.2} parent=1 // pred_region
      _
    $region53: #{_forward_impl.2} parent=1 // pred_fallthru
      _
    // Predicated region
    $region54: #{_forward_impl.2} parent=1 // pred_check
      _
    $region55: #{_forward_impl.2} parent=1 // pred_check_branch
      %333 = sbr.rel (0) target = $region57
    $region56: #{_forward_impl.2} parent=1 // pred_region
      _
    $region57: #{_forward_impl.2} parent=1 // pred_fallthru
      _
    %334 = vsyncpa [#allocation3], 1
    %335 = vsyncpa [#allocation5], 1

// kernel: _forward_impl.3
$region0: #{_forward_impl.3}
  #allocation0 [shape = 'u32[]', space=smem, size = 0x4, offset = 0x4, fixed_abs, tag = 'smem constant byte address 0x4 - core index']
  #allocation1 [shape = 'u32[144,128]{1,0:T(1,128)}', space=vmem, size = 0x12000, scoped, tag = 'internal scratch']
  %s0 = inlined_call_operand.vmem [shape: bf16[8,32], index: 0, kind: input, shape index: {}]
  %s1 = inlined_call_operand.vmem [shape: bf16[32,64], index: 1, kind: input, shape index: {}]
  %s2 = inlined_call_operand.hbm [shape: f32[8,64], index: 2, kind: output, shape index: {}]
  %s3 = sld [smem:[#allocation0]]
  $region18: #{_forward_impl.3} parent=0
    _
  %s5 = ssub.s32 1, %s3
  %s6 = scalar_select 0, %s5, %s3
  $region1: #{_forward_impl.3} parent=0
    #allocation2 [shape = 'u8[4096]{0}', space=vmem, size = 0x1000, scoped, tag = 'output window, operand 0, single buffered']
    #allocation3 [shape = 's32[1]{0}', space=sflag, size = 0x4, scoped, tag = 'scoped memory for _forward_impl.3']
    %7 = vsyncpa [#allocation3], 0
    // Predicated region
    $region2: #{_forward_impl.3} parent=1 // pred_check
      _
    $region3: #{_forward_impl.3} parent=1 // pred_check_branch
      %9 = sbr.rel (0) target = $region5
    $region4: #{_forward_impl.3} parent=1 // pred_region
      _
    $region5: #{_forward_impl.3} parent=1 // pred_fallthru
      _
    // Predicated region
    $region6: #{_forward_impl.3} parent=1 // pred_check
      _
    $region7: #{_forward_impl.3} parent=1 // pred_check_branch
      %11 = sbr.rel (0) target = $region9
    $region8: #{_forward_impl.3} parent=1 // pred_region
      _
    $region9: #{_forward_impl.3} parent=1 // pred_fallthru
      _
    %v13 = vld [vmem:[%s0] sm:$0xf]
    %v14 = vld [vmem:[%s1] sm:$0xf]
    %v15 = vld [vmem:[%s1 + $0x4] sm:$0xf]
    %v16 = vld [vmem:[%s1 + $0x8] sm:$0xf]
    %v17 = vld [vmem:[%s1 + $0xc] sm:$0xf]
    %v22 = vunpack.c.l.b16 %v14
    %v23 = vunpack.c.l.b16 %v15
    %v24 = vunpack.c.l.b16 %v16
    %v25 = vunpack.c.l.b16 %v17
    %v26 = vpack.c.b16 %v23, %v22
    %v27 = vpack.c.b16 %v25, %v24
    %vm30 = vcmask 261120
    %v32 = vsel %vm30, %v13, 0
    %34 = vmatprep.subr.bf16.mxu0 0
    %35 = vmatpush1.bf16.msra.mxu0 0
    %36 = vmatprep.subr.bf16.mxu0 0
    %37 = vmatpush1.bf16.msra.mxu0 0
    %38 = vmatprep.subr.bf16.mxu0 0
    %39 = vmatpush1.bf16.msra.mxu0 0
    %40 = vmatprep.subr.bf16.mxu0 0
    %41 = vmatpush1.bf16.msra.mxu0 0
    %42 = vmatprep.subr.bf16.mxu0 0
    %43 = vmatpush1.bf16.msra.mxu0 0
    %44 = vmatprep.subr.bf16.mxu0 0
    %45 = vmatpush1.bf16.msra.mxu0 0
    %46 = vmatprep.subr.bf16.mxu0 0
    %47 = vmatpush1.bf16.msra.mxu0 %v27
    %48 = vmatprep.subr.bf16.mxu0 0
    %49 = vmatpush1.bf16.msra.mxu0 %v26
    %50 = vmatprep.subr.bf16.mxu0 0
    %51 = vmatpush2.bf16.msra.mxu0 0
    %52 = vmatprep.subr.bf16.mxu0 0
    %53 = vmatpush2.bf16.msra.mxu0 0
    %54 = vmatprep.subr.bf16.mxu0 0
    %55 = vmatpush2.bf16.msra.mxu0 0
    %56 = vmatprep.subr.bf16.mxu0 0
    %57 = vmatpush2.bf16.msra.mxu0 0
    %58 = vmatprep.subr.bf16.mxu0 0
    %59 = vmatpush2.bf16.msra.mxu0 0
    %60 = vmatprep.subr.bf16.mxu0 0
    %61 = vmatpush2.bf16.msra.mxu0 0
    %62 = vmatprep.subr.bf16.mxu0 0
    %63 = vmatpush2.bf16.msra.mxu0 0
    %64 = vmatprep.subr.bf16.mxu0 0
    %65 = vmatpush2.bf16.msra.mxu0 0
    %66 = vmatprep.mubr.bf16.mxu0 0
    %67 = vmatmul.mubr.bf16.gmra.mxu0 %v32
    %v68 = vpop.f32.mrf.mxu0
    %v69 = vadd.f32 0.0, %v68
    %v70 = vpop.f32.mrf.mxu0
    %v71 = vpop.f32.mrf.mxu0
    %v72 = vpop.f32.mrf.mxu0
    %73 = vdwg.mxu0
    %v74 = vxor.u32 %v69, 2147483648
    %v75 = vmul.f32 %v74, 1.442695
    %v76 = vpow.pop %v75
    %v77 = vadd.f32 %v76, 1.0
    %v78 = vrcp.pop %v77
    %v79 = vmul.f32 1.0, %v78
    %vm80 = vcmask 523264
    %81 = vst.msk [vmem:[#allocation2] sm:$0xff] %vm80, %v79
    // Predicated region
    $region10: #{_forward_impl.3} parent=1 // pred_check
      _
    $region11: #{_forward_impl.3} parent=1 // pred_check_branch
      %83 = sbr.rel (0) target = $region13
    $region12: #{_forward_impl.3} parent=1 // pred_region
      %s85 = ssub.s32 128, 128
      %86 = vsyncadd [#allocation3], %s85
      %s88 = sshll.u32 [#allocation2], 4
      %s89 = int_to_ptr.vmem [resolvable:$true] %s88
      %91 = dma.vmem_to_hbm [thread:$0]  %s89, 128, %s2, [#allocation3]
    $region13: #{_forward_impl.3} parent=1 // pred_fallthru
      _
    // Predicated region
    $region14: #{_forward_impl.3} parent=1 // pred_check
      _
    $region15: #{_forward_impl.3} parent=1 // pred_check_branch
      %93 = sbr.rel (0) target = $region17
    $region16: #{_forward_impl.3} parent=1 // pred_region
      %94 = dma.done [#allocation3], 128
    $region17: #{_forward_impl.3} parent=1 // pred_fallthru
      _
    %95 = vsyncpa [#allocation3], 1

</llo_original>
